<compile_context>
chip_gen: v7x
topology: tpu7x:2x2x1
jax: 0.10.0
libtpu: 0.0.40
codegen_flags: <defaults>
</compile_context>

<pallas_src>
import functools

import jax
import jax.numpy as jnp
from jax.experimental import pallas as pl
from jax.experimental.pallas import tpu as pltpu


def _xe_loss_kernel(y_ref, x_ref, o_ref, *, n_total, tm):
    i = pl.program_id(0)

    y = y_ref[...].astype(jnp.float32)
    x = x_ref[...].astype(jnp.float32)

    # Numerically stable per-row pieces; only 2 exponentials per element.
    y_max = jnp.max(y, axis=1, keepdims=True)
    e_y = jnp.exp(y - y_max)
    s_y = jnp.sum(e_y, axis=1, keepdims=True)

    x_max = jnp.max(x, axis=1, keepdims=True)
    e_x = jnp.exp(x - x_max)
    s_x = jnp.sum(e_x, axis=1, keepdims=True)

    # sum_j softmax(y)_j * (log_softmax(x)_j - log_softmax(y)_j)
    #   = sum_j softmax(y)_j * (x_j - y_j) - (LSE(x) - LSE(y))
    p_dot = jnp.sum(e_y * (x - y), axis=1, keepdims=True) / s_y
    lse_x = x_max + jnp.log(s_x)
    lse_y = y_max + jnp.log(s_y)
    row = p_dot - (lse_x - lse_y)                       # (tm, 1)

    # Mask rows of the (possibly padded) tail block.
    row_ids = i * tm + jax.lax.broadcasted_iota(jnp.int32, row.shape, 0)
    row = jnp.where(row_ids < n_total, row, 0.0)

    partial = jnp.sum(row)
    # Lane-dense, unmasked (1, 8, 128) store; wrapper reads element [0, 0].
    o_ref[...] = jnp.broadcast_to(partial, o_ref.shape).astype(jnp.float32)


def _choose_tm(n, c, target_bytes=2 * 1024 * 1024):
    """Rows per block so one f32 block is ~2 MiB (safe on v5e/v6e/v7x)."""
    tm = (target_bytes // (4 * c)) // 8 * 8
    tm = max(8, int(tm))
    if tm >= n:
        return n            # single block covering the full batch
    return tm               # multiple of 8; tail handled by masking


def xe_loss(y, x, *, tm=None):
    """Pallas implementation of XeLoss.forward(y, x). Returns a scalar f32."""
    assert y.shape == x.shape and y.ndim == 2
    n, c = y.shape

    if tm is None:
        tm = _choose_tm(n, c)
    tm = min(int(tm), n)
    if tm < n:
        tm = max(8, (tm // 8) * 8)   # keep (8,128)-compliant sublane tiling
    num_blocks = pl.cdiv(n, tm)

    kernel = functools.partial(_xe_loss_kernel, n_total=n, tm=tm)

    partials = pl.pallas_call(
        kernel,
        out_shape=jax.ShapeDtypeStruct((num_blocks, 8, 128), jnp.float32),
        grid_spec=pltpu.PrefetchScalarGridSpec(
            num_scalar_prefetch=0,
            grid=(num_blocks,),
            in_specs=[
                pl.BlockSpec((tm, c), lambda i: (i, 0)),
                pl.BlockSpec((tm, c), lambda i: (i, 0)),
            ],
            out_specs=pl.BlockSpec((1, 8, 128), lambda i: (i, 0, 0)),
        ),
        compiler_params=pltpu.CompilerParams(
            dimension_semantics=("parallel",),
        ),
    )(y, x)

    # Tiny final reduction + normalization in the wrapper.
    return -jnp.sum(partials[:, 0, 0]) / n


def _xe_loss_ref(y, x):
    """Pure-JAX reference for correctness checking."""
    sm_y = jax.nn.softmax(y, axis=1)
    b = sm_y * jax.nn.log_softmax(x, axis=1) - sm_y * jax.nn.log_softmax(y, axis=1)
    return -jnp.sum(b) / x.shape[0]


if __name__ == "__main__":
    key = jax.random.PRNGKey(0)
    ky, kx = jax.random.split(key)

    # Small shapes: batch=20 (not a multiple of the 8-row tile -> exercises
    # the tail mask), classes=128.
    N, C = 20, 128
    y = jax.random.normal(ky, (N, C), dtype=jnp.float32)
    x = jax.random.normal(kx, (N, C), dtype=jnp.float32)

    # Multi-block pipelined path (3 blocks of 8 rows) and auto-tile path.
    loss_tiled = jax.block_until_ready(xe_loss(y, x, tm=8))
    loss_auto = jax.block_until_ready(xe_loss(y, x))
    ref = jax.block_until_ready(_xe_loss_ref(y, x))

    assert jnp.allclose(loss_tiled, ref, rtol=1e-5, atol=1e-5), (loss_tiled, ref)
    assert jnp.allclose(loss_auto, ref, rtol=1e-5, atol=1e-5), (loss_auto, ref)
    print("KERNEL_OK")
</pallas_src>

<mosaic_0001>
module attributes {stable_mosaic.version = 11 : i64} {
  func.func @_xe_loss_kernel(%arg0: i32, %arg1: memref<8x128xf32, #tpu.memory_space<vmem>>, %arg2: memref<8x128xf32, #tpu.memory_space<vmem>>, %arg3: memref<1x8x128xf32, #tpu.memory_space<vmem>>) attributes {dimension_semantics = [#tpu.dimension_semantics<parallel>], iteration_bounds = array<i64: 3>, scalar_prefetch = 0 : i64, scratch_operands = 0 : i64, tpu.core_type = #tpu.core_type<tc>, window_params = [{transform_indices = @transform_0, window_bounds = array<i64: 8, 128>}, {transform_indices = @transform_1, window_bounds = array<i64: 8, 128>}, {transform_indices = @transform_2, window_bounds = array<i64: 1, 8, 128>}]} {
    %c0 = arith.constant 0 : index
    %c0_0 = arith.constant 0 : index
    %0 = vector.load %arg1[%c0, %c0_0] : memref<8x128xf32, #tpu.memory_space<vmem>>, vector<8x128xf32>
    %c0_1 = arith.constant 0 : index
    %c0_2 = arith.constant 0 : index
    %1 = vector.load %arg2[%c0_1, %c0_2] : memref<8x128xf32, #tpu.memory_space<vmem>>, vector<8x128xf32>
    %cst = arith.constant dense<0xFF800000> : vector<8xf32>
    %2 = vector.multi_reduction <maximumf>, %0, %cst [1] : vector<8x128xf32> to vector<8xf32>
    %3 = vector.shape_cast %2 : vector<8xf32> to vector<8x1xf32>
    %4 = vector.broadcast %3 : vector<8x1xf32> to vector<8x128xf32>
    %5 = arith.subf %0, %4 : vector<8x128xf32>
    %6 = math.exp %5 : vector<8x128xf32>
    %cst_3 = arith.constant dense<0.000000e+00> : vector<8xf32>
    %7 = vector.multi_reduction <add>, %6, %cst_3 [1] : vector<8x128xf32> to vector<8xf32>
    %8 = vector.shape_cast %7 : vector<8xf32> to vector<8x1xf32>
    %cst_4 = arith.constant dense<0xFF800000> : vector<8xf32>
    %9 = vector.multi_reduction <maximumf>, %1, %cst_4 [1] : vector<8x128xf32> to vector<8xf32>
    %10 = vector.shape_cast %9 : vector<8xf32> to vector<8x1xf32>
    %11 = vector.broadcast %10 : vector<8x1xf32> to vector<8x128xf32>
    %12 = arith.subf %1, %11 : vector<8x128xf32>
    %13 = math.exp %12 : vector<8x128xf32>
    %cst_5 = arith.constant dense<0.000000e+00> : vector<8xf32>
    %14 = vector.multi_reduction <add>, %13, %cst_5 [1] : vector<8x128xf32> to vector<8xf32>
    %15 = vector.shape_cast %14 : vector<8xf32> to vector<8x1xf32>
    %16 = arith.subf %1, %0 : vector<8x128xf32>
    %17 = arith.mulf %6, %16 : vector<8x128xf32>
    %cst_6 = arith.constant dense<0.000000e+00> : vector<8xf32>
    %18 = vector.multi_reduction <add>, %17, %cst_6 [1] : vector<8x128xf32> to vector<8xf32>
    %19 = vector.shape_cast %18 : vector<8xf32> to vector<8x1xf32>
    %20 = arith.divf %19, %8 : vector<8x1xf32>
    %21 = math.log %15 : vector<8x1xf32>
    %22 = arith.addf %10, %21 : vector<8x1xf32>
    %23 = math.log %8 : vector<8x1xf32>
    %24 = arith.addf %3, %23 : vector<8x1xf32>
    %25 = arith.subf %22, %24 : vector<8x1xf32>
    %26 = arith.subf %20, %25 : vector<8x1xf32>
    %c8_i32 = arith.constant 8 : i32
    %27 = arith.muli %arg0, %c8_i32 : i32
    %28 = tpu.iota {dimensions = array<i32: 0>} : vector<8x1xi32>
    %29 = vector.broadcast %27 : i32 to vector<8x1xi32>
    %30 = arith.addi %29, %28 : vector<8x1xi32>
    %c20_i32 = arith.constant 20 : i32
    %31 = vector.broadcast %c20_i32 : i32 to vector<8x1xi32>
    %32 = arith.cmpi slt, %30, %31 : vector<8x1xi32>
    %cst_7 = arith.constant 0.000000e+00 : f32
    %33 = vector.broadcast %cst_7 : f32 to vector<8x1xf32>
    %34 = arith.select %32, %26, %33 : vector<8x1xi1>, vector<8x1xf32>
    %35 = vector.shape_cast %34 : vector<8x1xf32> to vector<1x8x1xf32>
    %cst_8 = arith.constant dense<0.000000e+00> : vector<1xf32>
    %36 = vector.multi_reduction <add>, %35, %cst_8 [1, 2] : vector<1x8x1xf32> to vector<1xf32>
    %37 = vector.shape_cast %36 : vector<1xf32> to vector<1x1x1xf32>
    %38 = vector.extract %37[0, 0, 0] : f32 from vector<1x1x1xf32>
    %39 = vector.broadcast %38 : f32 to vector<1x8x128xf32>
    %c0_9 = arith.constant 0 : index
    %c0_10 = arith.constant 0 : index
    %c0_11 = arith.constant 0 : index
    %40 = vector.load %arg3[%c0_9, %c0_10, %c0_11] : memref<1x8x128xf32, #tpu.memory_space<vmem>>, vector<1x8x128xf32>
    tpu.vector_store %arg3[%c0_9, %c0_10, %c0_11], %39 {strides = array<i32>} : memref<1x8x128xf32, #tpu.memory_space<vmem>>, vector<1x8x128xf32>,
    return
  }
  func.func @transform_0(%arg0: i32) -> (i32, i32) {
    %c0_i32 = arith.constant 0 : i32
    %c0_i32_0 = arith.constant 0 : i32
    return %arg0, %c0_i32 : i32, i32
  }
  func.func @transform_1(%arg0: i32) -> (i32, i32) {
    %c0_i32 = arith.constant 0 : i32
    %c0_i32_0 = arith.constant 0 : i32
    return %arg0, %c0_i32 : i32, i32
  }
  func.func @transform_2(%arg0: i32) -> (i32, i32, i32) {
    %c0_i32 = arith.constant 0 : i32
    %c0_i32_0 = arith.constant 0 : i32
    %c0_i32_1 = arith.constant 0 : i32
    return %arg0, %c0_i32, %c0_i32_0 : i32, i32, i32
  }
}

</mosaic_0001>

<llo_original>
// kernel: tpu_custom_call.1
$region0: #{tpu_custom_call.1}
  #allocation0 [shape = 'u32[]', space=smem, size = 0x4, offset = 0x4, fixed_abs, tag = 'smem constant byte address 0x4 - core index']
  #allocation1 [shape = 'u32[144,128]{1,0:T(1,128)}', space=vmem, size = 0x12000, scoped, tag = 'internal scratch']
  %s0 = inlined_call_operand.hbm [shape: f32[20,128], index: 0, kind: input, shape index: {}]
  %s1 = inlined_call_operand.hbm [shape: f32[20,128], index: 1, kind: input, shape index: {}]
  %s2 = inlined_call_operand.hbm [shape: f32[3,8,128], index: 2, kind: output, shape index: {}]
  %s3 = sld [smem:[#allocation0]]
  $region49: #{tpu_custom_call.1} parent=0
    _
  %s5 = ssub.s32 1, %s3
  %s6 = scalar_select 0, %s5, %s3
  $region1: #{tpu_custom_call.1} parent=0
    #allocation2 [shape = 'u8[8192]{0}', space=vmem, size = 0x2000, scoped, tag = 'input window, operand 0']
    #allocation3 [shape = 's32[2]{0}', space=sflag, size = 0x8, scoped, tag = 'scoped memory for tpu_custom_call.1']
    #allocation4 [shape = 's32[2]{0}', space=sflag, size = 0x8, scoped, tag = 'scoped memory for tpu_custom_call.1']
    #allocation5 [shape = 'u8[8192]{0}', space=vmem, size = 0x2000, scoped, tag = 'input window, operand 1']
    #allocation6 [shape = 's32[2]{0}', space=sflag, size = 0x8, scoped, tag = 'scoped memory for tpu_custom_call.1']
    #allocation7 [shape = 'u8[8192]{0}', space=vmem, size = 0x2000, scoped, tag = 'output window, operand 0']
    %7 = vsyncpa [#allocation3], 0
    %s8 = scalar_lea.sflag [#allocation3], 1
    %9 = vsyncpa %s8, 0
    %10 = vsyncpa [#allocation6], 0
    %s11 = scalar_lea.sflag [#allocation6], 1
    %12 = vsyncpa %s11, 0
    %13 = vsyncpa [#allocation4], 0
    %s14 = scalar_lea.sflag [#allocation4], 1
    %15 = vsyncpa %s14, 0
    loop: start=0, step=1, limit=5
    $region2: #{tpu_custom_call.1} parent=1 // loop_pre_header
      _
    $region3: #{tpu_custom_call.1} parent=1 // loop_header
      %s17 = sphi 0, %s21
      %p18 = scmp.ge.s32.totalorder %s17, 5
      %s27 = sphi 0, %s29
      %s30 = sphi 0, %s27
      %s31 = sphi 0, %s30
      %s47 = sphi 0, %s31
      %s53 = sphi 0, %s55
      %s56 = sphi 0, %s53
      %s57 = sphi 0, %s56
      %s73 = sphi 0, %s57
      %s79 = sphi 0, %s81
      %s82 = sphi 0, %s79
      %s83 = sphi 0, %s82
      %s99 = sphi 0, %s83
    $region4: #{tpu_custom_call.1} parent=1 // loop_header_branch
      %20 = sbr.rel (%p18) target = $region8
    $region5: #{tpu_custom_call.1} parent=1 // loop_body
      %s22 = ssub.s32 %s17, 1
      %s23 = ssub.s32 %s17, 2
      %s24 = sadd.s32 %s17, 1
      %s25 = ssub.s32 %s17, %s24
      %p26 = scmp.eq.s32.totalorder %s25, 0
      %s28 = sadd.s32 %s27, 1
      %s29 = scalar_select %p26, %s27, %s28
      %p32 = pneg %p26
      %p33 = scmp.eq.s32.totalorder %s17, 2
      %p34 = por %p32, %p33
      %p35 = scmp.ne.s32.totalorder %s27, %s30
      %p36 = scmp.eq.s32.totalorder %s17, 0
      %p37 = por %p35, %p36
      %p38 = scmp.ne.s32.totalorder %s27, %s30
      %p39 = scmp.eq.s32.totalorder %s22, 2
      %p40 = por %p38, %p39
      %p41 = scmp.ne.s32.totalorder %s30, %s31
      %p42 = scmp.eq.s32.totalorder %s22, 0
      %p43 = por %p41, %p42
      %p44 = scmp.ne.s32.totalorder %s30, %s31
      %p45 = scmp.eq.s32.totalorder %s23, 2
      %p46 = por %p44, %p45
      %p48 = scmp.ne.s32.totalorder %s31, %s47
      %p49 = scmp.eq.s32.totalorder %s23, 0
      %p50 = por %p48, %p49
      %s51 = ssub.s32 %s17, %s24
      %p52 = scmp.eq.s32.totalorder %s51, 0
      %s54 = sadd.s32 %s53, 1
      %s55 = scalar_select %p52, %s53, %s54
      %p58 = pneg %p52
      %p59 = scmp.eq.s32.totalorder %s17, 2
      %p60 = por %p58, %p59
      %p61 = scmp.ne.s32.totalorder %s53, %s56
      %p62 = scmp.eq.s32.totalorder %s17, 0
      %p63 = por %p61, %p62
      %p64 = scmp.ne.s32.totalorder %s53, %s56
      %p65 = scmp.eq.s32.totalorder %s22, 2
      %p66 = por %p64, %p65
      %p67 = scmp.ne.s32.totalorder %s56, %s57
      %p68 = scmp.eq.s32.totalorder %s22, 0
      %p69 = por %p67, %p68
      %p70 = scmp.ne.s32.totalorder %s56, %s57
      %p71 = scmp.eq.s32.totalorder %s23, 2
      %p72 = por %p70, %p71
      %p74 = scmp.ne.s32.totalorder %s57, %s73
      %p75 = scmp.eq.s32.totalorder %s23, 0
      %p76 = por %p74, %p75
      %s77 = ssub.s32 %s17, %s24
      %p78 = scmp.eq.s32.totalorder %s77, 0
      %s80 = sadd.s32 %s79, 1
      %s81 = scalar_select %p78, %s79, %s80
      %p84 = pneg %p78
      %p85 = scmp.eq.s32.totalorder %s17, 2
      %p86 = por %p84, %p85
      %p87 = scmp.ne.s32.totalorder %s79, %s82
      %p88 = scmp.eq.s32.totalorder %s17, 0
      %p89 = por %p87, %p88
      %p90 = scmp.ne.s32.totalorder %s79, %s82
      %p91 = scmp.eq.s32.totalorder %s22, 2
      %p92 = por %p90, %p91
      %p93 = scmp.ne.s32.totalorder %s82, %s83
      %p94 = scmp.eq.s32.totalorder %s22, 0
      %p95 = por %p93, %p94
      %p96 = scmp.ne.s32.totalorder %s82, %s83
      %p97 = scmp.eq.s32.totalorder %s23, 2
      %p98 = por %p96, %p97
      %p100 = scmp.ne.s32.totalorder %s83, %s99
      %p101 = scmp.eq.s32.totalorder %s23, 0
      %p102 = por %p100, %p101
      %p103 = scmp.le.s32.totalorder 1, %s17
      %p104 = scmp.lt.s32.totalorder %s17, 4
      %p105 = pnand %p103, %p104
      %p106 = pneg %p105
      // Predicated region
      $region9: #{tpu_custom_call.1} parent=5 // pred_check
        _
      $region10: #{tpu_custom_call.1} parent=5 // pred_check_branch
        %108 = sbr.rel (%p105) target = $region12
      $region11: #{tpu_custom_call.1} parent=5 // pred_region
        %s109 = ssub.s32 %s17, 1
      $region12: #{tpu_custom_call.1} parent=5 // pred_fallthru
        _
      %p110 = scmp.lt.s32.totalorder %s17, 3
      // Predicated region
      $region13: #{tpu_custom_call.1} parent=5 // pred_check
        %p111 = pneg %p110
      $region14: #{tpu_custom_call.1} parent=5 // pred_check_branch
        %113 = sbr.rel (%p111) target = $region16
      $region15: #{tpu_custom_call.1} parent=5 // pred_region
        // Predicated region
        $region17: #{tpu_custom_call.1} parent=15 // pred_check
          %p114 = pneg %p37
        $region18: #{tpu_custom_call.1} parent=15 // pred_check_branch
          %116 = sbr.rel (%p114) target = $region20
        $region19: #{tpu_custom_call.1} parent=15 // pred_region
          %s117 = sand.u32 %s27, 1
          %s118 = scalar_lea.sflag [#allocation3], %s117
          %s119 = sand.u32 %s27, 1
          %s120 = smul.addr %s119, 8
          %s121 = scalar_lea.vmem [#allocation2], %s120
          %s123 = ssub.s32 128, 128
          %124 = vsyncadd %s118, %s123
          %s125 = smul.addr %s17, 128
          %s126 = scalar_lea.hbm %s0, %s125
          %s128 = sshll.u32 %s121, 4
          %s129 = int_to_ptr.vmem [resolvable:$true] %s128
          %131 = dma.hbm_to_vmem [thread:$0]  %s126, 128, %s129, %s118
        $region20: #{tpu_custom_call.1} parent=15 // pred_fallthru
          _
        // Predicated region
        $region21: #{tpu_custom_call.1} parent=15 // pred_check
          %p132 = pneg %p63
        $region22: #{tpu_custom_call.1} parent=15 // pred_check_branch
          %134 = sbr.rel (%p132) target = $region24
        $region23: #{tpu_custom_call.1} parent=15 // pred_region
          %s135 = sand.u32 %s53, 1
          %s136 = scalar_lea.sflag [#allocation6], %s135
          %s137 = sand.u32 %s53, 1
          %s138 = smul.addr %s137, 8
          %s139 = scalar_lea.vmem [#allocation5], %s138
          %s141 = ssub.s32 128, 128
          %142 = vsyncadd %s136, %s141
          %s143 = smul.addr %s17, 128
          %s144 = scalar_lea.hbm %s1, %s143
          %s146 = sshll.u32 %s139, 4
          %s147 = int_to_ptr.vmem [resolvable:$true] %s146
          %149 = dma.hbm_to_vmem [thread:$0]  %s144, 128, %s147, %s136
        $region24: #{tpu_custom_call.1} parent=15 // pred_fallthru
          _
      $region16: #{tpu_custom_call.1} parent=5 // pred_fallthru
        _
      %p150 = scmp.le.s32.totalorder 1, %s17
      %p151 = scmp.lt.s32.totalorder %s17, 4
      %p152 = pnand %p150, %p151
      %p153 = pneg %p152
      // Predicated region
      $region25: #{tpu_custom_call.1} parent=5 // pred_check
        _
      $region26: #{tpu_custom_call.1} parent=5 // pred_check_branch
        %155 = sbr.rel (%p152) target = $region28
      $region27: #{tpu_custom_call.1} parent=5 // pred_region
        %s156 = ssub.s32 %s17, 1
        %s157 = sand.u32 %s30, 1
        %s158 = scalar_lea.sflag [#allocation3], %s157
        %s159 = sand.u32 %s30, 1
        %s160 = smul.addr %s159, 8
        %s161 = scalar_lea.vmem [#allocation2], %s160
        // Predicated region
        $region29: #{tpu_custom_call.1} parent=27 // pred_check
          %p162 = pneg %p43
        $region30: #{tpu_custom_call.1} parent=27 // pred_check_branch
          %164 = sbr.rel (%p162) target = $region32
        $region31: #{tpu_custom_call.1} parent=27 // pred_region
          %165 = dma.done %s158, 128
        $region32: #{tpu_custom_call.1} parent=27 // pred_fallthru
          _
        %s166 = sand.u32 %s56, 1
        %s167 = scalar_lea.sflag [#allocation6], %s166
        %s168 = sand.u32 %s56, 1
        %s169 = smul.addr %s168, 8
        %s170 = scalar_lea.vmem [#allocation5], %s169
        // Predicated region
        $region33: #{tpu_custom_call.1} parent=27 // pred_check
          %p171 = pneg %p69
        $region34: #{tpu_custom_call.1} parent=27 // pred_check_branch
          %173 = sbr.rel (%p171) target = $region36
        $region35: #{tpu_custom_call.1} parent=27 // pred_region
          %174 = dma.done %s167, 128
        $region36: #{tpu_custom_call.1} parent=27 // pred_fallthru
          _
        %s175 = sand.u32 %s30, 1
        %s176 = scalar_lea.sflag [#allocation3], %s175
        %s177 = sand.u32 %s30, 1
        %s178 = smul.addr %s177, 8
        %s179 = scalar_lea.vmem [#allocation2], %s178
        %p180 = pneg %p43
        %p181 = pneg %p40
        %s182 = sand.u32 %s56, 1
        %s183 = scalar_lea.sflag [#allocation6], %s182
        %s184 = sand.u32 %s56, 1
        %s185 = smul.addr %s184, 8
        %s186 = scalar_lea.vmem [#allocation5], %s185
        %p187 = pneg %p69
        %p188 = pneg %p66
        %p189 = pneg %p95
        %p190 = pneg %p92
        %s191 = sand.u32 %s82, 1
        %s192 = scalar_lea.sflag [#allocation4], %s191
        %s193 = sand.u32 %s82, 1
        %s194 = smul.addr %s193, 8
        %s195 = scalar_lea.vmem [#allocation7], %s194
        %v196 = vld [vmem:[%s161] sm:$0xff]
        %v197 = vld [vmem:[%s170] sm:$0xff]
        %198 = vmax.xlane.f32.xlu0 %v196
        %v199 = vpop.xlane.xlu0 %198
        %v200 = vsub.f32 %v196, %v199
        %v201 = vmul.f32 %v200, 1.442695
        %v202 = vpow.pop %v201
        %203 = vadd.xlane.f32.xlu0 %v202
        %v204 = vpop.xlane.xlu0 %203
        %205 = vmax.xlane.f32.xlu0 %v197
        %v206 = vpop.xlane.xlu0 %205
        %v207 = vsub.f32 %v197, %v206
        %v208 = vmul.f32 %v207, 1.442695
        %v209 = vpow.pop %v208
        %210 = vadd.xlane.f32.xlu0 %v209
        %v211 = vpop.xlane.xlu0 %210
        %v212 = vsub.f32 %v197, %v196
        %v213 = vmul.f32 %v202, %v212
        %214 = vadd.xlane.f32.xlu0 %v213
        %v215 = vpop.xlane.xlu0 %214
        %v216 = vrcp.pop %v204
        %v217 = vmul.f32 %v215, %v216
        %v218 = vlog2.pop %v211
        %v219 = vmul.f32 %v218, 0.6931472
        %v220 = vadd.f32 %v206, %v219
        %v221 = vlog2.pop %v204
        %v222 = vmul.f32 %v221, 0.6931472
        %v223 = vadd.f32 %v199, %v222
        %v224 = vsub.f32 %v220, %v223
        %v225 = vsub.f32 %v217, %v224
        %s226 = smul.u32 %s22, 8
        %v227 = vlaneseq
        %v228 = vshrl.u32 %v227, 7
        %v229 = vstv %s226
        %v230 = vadd.s32 %v229, %v228
        %vm231 = vcmp.lt.s32.totalorder %v230, 20
        %v232 = vsel %vm231, %v225, 0.0
        %vm233 = vcmask 7168
        %v234 = vsel %vm233, %v232, 0.0
        %235 = vadd.xlane.f32.xlu0 %v234
        %v236 = vpop.xlane.xlu0 %235
        %v237 = vrot.slane %v236, 4
        %v238 = vadd.f32 %v236, %v237
        %v239 = vrot.slane %v238, 2
        %v240 = vadd.f32 %v238, %v239
        %v241 = vrot.slane %v240, 1
        %v242 = vadd.f32 %v240, %v241
        %s243 = vtos %v242
        %v244 = vstv %s243
        %245 = vst [vmem:[%s195] sm:$0xff] %v244
        %s246 = sand.u32 %s82, 1
        %s247 = scalar_lea.sflag [#allocation4], %s246
        %s248 = sand.u32 %s82, 1
        %s249 = smul.addr %s248, 8
        %s250 = scalar_lea.vmem [#allocation7], %s249
        // Predicated region
        $region37: #{tpu_custom_call.1} parent=27 // pred_check
          %p251 = pneg %p92
        $region38: #{tpu_custom_call.1} parent=27 // pred_check_branch
          %253 = sbr.rel (%p251) target = $region40
        $region39: #{tpu_custom_call.1} parent=27 // pred_region
          %s255 = ssub.s32 128, 128
          %256 = vsyncadd %s247, %s255
          %s257 = smul.addr %s22, 128
          %s258 = scalar_lea.hbm %s2, %s257
          %s260 = sshll.u32 %s250, 4
          %s261 = int_to_ptr.vmem [resolvable:$true] %s260
          %263 = dma.vmem_to_hbm [thread:$0]  %s261, 128, %s258, %s247
        $region40: #{tpu_custom_call.1} parent=27 // pred_fallthru
          _
      $region28: #{tpu_custom_call.1} parent=5 // pred_fallthru
        _
      %p264 = scmp.le.s32.totalorder 2, %s17
      // Predicated region
      $region41: #{tpu_custom_call.1} parent=5 // pred_check
        %p265 = pneg %p264
      $region42: #{tpu_custom_call.1} parent=5 // pred_check_branch
        %267 = sbr.rel (%p265) target = $region44
      $region43: #{tpu_custom_call.1} parent=5 // pred_region
        %s268 = ssub.s32 %s17, 2
        // Predicated region
        $region45: #{tpu_custom_call.1} parent=43 // pred_check
          %p269 = pneg %p98
        $region46: #{tpu_custom_call.1} parent=43 // pred_check_branch
          %271 = sbr.rel (%p269) target = $region48
        $region47: #{tpu_custom_call.1} parent=43 // pred_region
          %s272 = sand.u32 %s83, 1
          %s273 = scalar_lea.sflag [#allocation4], %s272
          %s274 = sand.u32 %s83, 1
          %s275 = smul.addr %s274, 8
          %s276 = scalar_lea.vmem [#allocation7], %s275
          %277 = dma.done %s273, 128
        $region48: #{tpu_custom_call.1} parent=43 // pred_fallthru
          _
      $region44: #{tpu_custom_call.1} parent=5 // pred_fallthru
        _
    $region6: #{tpu_custom_call.1} parent=1 // loop_footer
      %s21 = sadd.s32 1, %s17
    $region7: #{tpu_custom_call.1} parent=1 // loop_footer_branch
      %16 = sbr.rel target = $region3
    $region8: #{tpu_custom_call.1} parent=1 // loop_exit
      _
    %278 = vsyncpa [#allocation3], 1
    %s279 = scalar_lea.sflag [#allocation3], 1
    %280 = vsyncpa %s279, 1
    %281 = vsyncpa [#allocation6], 1
    %s282 = scalar_lea.sflag [#allocation6], 1
    %283 = vsyncpa %s282, 1
    %284 = vsyncpa [#allocation4], 1
    %s285 = scalar_lea.sflag [#allocation4], 1
    %286 = vsyncpa %s285, 1

</llo_original>
